<compile_context>
chip_gen: v6e
topology: v6e:2x2x1
jax: 0.10.0
libtpu: 0.0.40
codegen_flags: <defaults>
</compile_context>

<pallas_src>
import math
from functools import partial

import jax
import jax.numpy as jnp
from jax.experimental import pallas as pl
from jax.experimental.pallas import tpu as pltpu


# ----------------------------------------------------------------------------
# Pure-JAX positional-encoding table (reference only; kernel recomputes it).
# ----------------------------------------------------------------------------
def make_positional_encoding_table(max_len: int, d_model: int,
                                   dtype=jnp.float32) -> jax.Array:
    position = jnp.arange(0.0, max_len, dtype=jnp.float32)[:, None]       # (L, 1)
    div_term = jnp.exp(jnp.arange(0.0, d_model, 2.0, dtype=jnp.float32)
                       * (-(math.log(10000.0) / d_model)))                # (D/2,)
    pe = jnp.zeros((max_len, d_model), dtype=jnp.float32)
    pe = pe.at[:, 0::2].set(jnp.sin(position * div_term))
    pe = pe.at[:, 1::2].set(jnp.cos(position * div_term))
    return pe[None, :, :].astype(dtype)                                   # (1, L, D)


# ----------------------------------------------------------------------------
# Kernel
# ----------------------------------------------------------------------------
def _make_pe_kernel(*, p: float, training: bool, d_model: int, row_tile: int):
    keep = 1.0 - p
    neg_log_scale = -math.log(10000.0) / d_model

    def kernel(seed_ref, x_ref, pos_ref, o_ref):
        shape = x_ref.shape                                   # (TR, D)
        cols = jax.lax.broadcasted_iota(jnp.int32, shape, 1)  # lane index
        # even_col = 2 * (col // 2), without integer division.
        even_col = (cols - (cols & 1)).astype(jnp.float32)
        inv_freq = jnp.exp(even_col * jnp.float32(neg_log_scale))
        angle = pos_ref[...] * inv_freq                       # (TR,1)*(TR,D)
        pe = jnp.where((cols & 1) == 0, jnp.sin(angle), jnp.cos(angle))

        y = x_ref[...].astype(jnp.float32) + pe

        if training and p > 0.0:
            if p >= 1.0:
                y = jnp.zeros_like(y)
            else:
                # Counter-based hash PRNG: unique 32-bit stream per element
                # (global flat index), seeded from SMEM scalar.
                row0 = pl.program_id(0) * row_tile
                rows = row0 + jax.lax.broadcasted_iota(jnp.int32, shape, 0)
                flat = (rows * d_model + cols).astype(jnp.uint32)
                seed_u = seed_ref[0].astype(jnp.uint32)
                h = flat * jnp.uint32(0x9E3779B1)
                h = h ^ (seed_u * jnp.uint32(0x85EBCA77) + jnp.uint32(0xC2B2AE3D))
                h = h ^ (h >> 15)
                h = h * jnp.uint32(0x2C1B3C6D)
                h = h ^ (h >> 12)
                h = h * jnp.uint32(0x297A2D39)
                h = h ^ (h >> 15)
                thr = jnp.uint32(min(int(keep * 4294967296.0), 4294967295))
                # Inverted dropout, scale fused into the select.
                y = jnp.where(h < thr, y * jnp.float32(1.0 / keep),
                              jnp.float32(0.0))

        o_ref[...] = y.astype(o_ref.dtype)

    return kernel


def _pick_row_tile(n_rows: int, d_model: int) -> int:
    """~2 MiB f32 row tile (safe for v5e 16 MiB scoped / v7x 64 MiB physical
    with x + out double-buffered), multiple of 8 sublanes."""
    target = (2 * 1024 * 1024) // max(1, d_model * 4)
    tr = max(8, (target // 8) * 8)
    tr = min(tr, 2048)
    if n_rows <= tr:
        return n_rows          # full extent is always a legal block dim
    return tr


# ----------------------------------------------------------------------------
# Wrapper
# ----------------------------------------------------------------------------
def positional_encoding_forward(x: jax.Array,
                                *,
                                p: float = 0.2,
                                training: bool = False,
                                seed: int = 0) -> jax.Array:
    """x: (B, S, D).  Returns x + pe[:, :S] (with dropout if training)."""
    B, S, D = x.shape
    out_dtype = jnp.promote_types(x.dtype, jnp.float32)   # torch promotes vs f32 pe

    n_rows = B * S
    x2 = x.reshape(n_rows, D)
    # Sequence position of every flattened row (tiny: 4 bytes/row).
    pos = jnp.tile(jnp.arange(S, dtype=jnp.float32), B).reshape(n_rows, 1)

    tr = _pick_row_tile(n_rows, D)
    grid = (pl.cdiv(n_rows, tr),)
    seed_arr = jnp.array([seed], dtype=jnp.int32)

    kernel = _make_pe_kernel(p=p, training=training, d_model=D, row_tile=tr)

    grid_spec = pltpu.PrefetchScalarGridSpec(
        num_scalar_prefetch=1,                      # seed lands in SMEM
        grid=grid,
        in_specs=[
            pl.BlockSpec((tr, D), lambda t, s: (t, 0)),   # x rows
            pl.BlockSpec((tr, 1), lambda t, s: (t, 0)),   # seq positions
        ],
        out_specs=pl.BlockSpec((tr, D), lambda t, s: (t, 0)),
    )

    out2 = pl.pallas_call(
        kernel,
        out_shape=jax.ShapeDtypeStruct((n_rows, D), out_dtype),
        grid_spec=grid_spec,
        compiler_params=pltpu.CompilerParams(
            dimension_semantics=("parallel",)),     # independent tiles
    )(seed_arr, x2, pos)

    return out2.reshape(B, S, D)


# ----------------------------------------------------------------------------
# Demo / self-check
# ----------------------------------------------------------------------------
if __name__ == "__main__":
    # Small shapes consistent with the module's forward: (batch, seq, d_model).
    B, S, D = 2, 8, 32
    MAX_LEN = 64

    key = jax.random.PRNGKey(0)
    x = jax.random.normal(key, (B, S, D), dtype=jnp.float32)

    pe = make_positional_encoding_table(MAX_LEN, D, dtype=jnp.float32)

    # Eval-mode forward (dropout is identity, as in nn.Dropout.eval()).
    out = positional_encoding_forward(x, p=0.2, training=False)
    out = jax.block_until_ready(out)
    ref = x + pe[:, :S, :]
    assert out.shape == (B, S, D)
    assert jnp.allclose(out, ref, atol=1e-4, rtol=1e-4), "eval-mode mismatch"

    # Second check that exercises the multi-tile grid (including the partial
    # last tile) with a lane-dense d_model.
    B2, S2, D2 = 4, 384, 512
    x_big = jax.random.normal(jax.random.PRNGKey(1), (B2, S2, D2),
                              dtype=jnp.float32)
    pe_big = make_positional_encoding_table(S2, D2, dtype=jnp.float32)
    out_big = jax.block_until_ready(
        positional_encoding_forward(x_big, p=0.2, training=False))
    ref_big = x_big + pe_big[:, :S2, :]
    assert jnp.allclose(out_big, ref_big, atol=1e-4, rtol=1e-4), "tiled mismatch"

    # Training-mode (stochastic inverted dropout) path.
    out_train = positional_encoding_forward(x, p=0.2, training=True, seed=123)
    out_train = jax.block_until_ready(out_train)
    assert out_train.shape == (B, S, D)
    assert bool(jnp.all(jnp.isfinite(out_train)))
    # Kept elements equal (x + pe) / keep; dropped are exactly zero.
    kept = out_train != 0.0
    assert bool(jnp.all(jnp.where(kept,
                                  jnp.abs(out_train - ref / 0.8) < 1e-3,
                                  True)))

    print("KERNEL_OK")
</pallas_src>

<mosaic_0001>
module attributes {stable_mosaic.version = 11 : i64} {
  func.func @kernel(%arg0: i32, %arg1: memref<1xi32, #tpu.memory_space<smem>>, %arg2: memref<16x32xf32, #tpu.memory_space<vmem>>, %arg3: memref<16x1xf32, #tpu.memory_space<vmem>>, %arg4: memref<16x32xf32, #tpu.memory_space<vmem>>) attributes {dimension_semantics = [#tpu.dimension_semantics<parallel>], iteration_bounds = array<i64: 1>, scalar_prefetch = 1 : i64, scratch_operands = 0 : i64, tpu.core_type = #tpu.core_type<tc>, window_params = [{transform_indices = @transform_0, window_bounds = array<i64: 16, 32>}, {transform_indices = @transform_1, window_bounds = array<i64: 16, 1>}, {transform_indices = @transform_2, window_bounds = array<i64: 16, 32>}]} {
    %0 = tpu.iota {dimensions = array<i32: 1>} : vector<16x32xi32>
    %c1_i32 = arith.constant 1 : i32
    %1 = vector.broadcast %c1_i32 : i32 to vector<16x32xi32>
    %2 = arith.andi %0, %1 : vector<16x32xi32>
    %3 = arith.subi %0, %2 : vector<16x32xi32>
    %4 = arith.sitofp %3 : vector<16x32xi32> to vector<16x32xf32>
    %cst = arith.constant -0.287823141 : f32
    %5 = vector.broadcast %cst : f32 to vector<16x32xf32>
    %6 = arith.mulf %4, %5 : vector<16x32xf32>
    %7 = math.exp %6 : vector<16x32xf32>
    %c0 = arith.constant 0 : index
    %c0_0 = arith.constant 0 : index
    %8 = vector.load %arg3[%c0, %c0_0] : memref<16x1xf32, #tpu.memory_space<vmem>>, vector<16x1xf32>
    %9 = vector.broadcast %8 : vector<16x1xf32> to vector<16x32xf32>
    %10 = arith.mulf %9, %7 : vector<16x32xf32>
    %c1_i32_1 = arith.constant 1 : i32
    %11 = vector.broadcast %c1_i32_1 : i32 to vector<16x32xi32>
    %12 = arith.andi %0, %11 : vector<16x32xi32>
    %c0_i32 = arith.constant 0 : i32
    %13 = vector.broadcast %c0_i32 : i32 to vector<16x32xi32>
    %14 = arith.cmpi eq, %12, %13 : vector<16x32xi32>
    %15 = math.sin %10 : vector<16x32xf32>
    %16 = math.cos %10 : vector<16x32xf32>
    %17 = arith.select %14, %15, %16 : vector<16x32xi1>, vector<16x32xf32>
    %c0_2 = arith.constant 0 : index
    %c0_3 = arith.constant 0 : index
    %18 = vector.load %arg2[%c0_2, %c0_3] : memref<16x32xf32, #tpu.memory_space<vmem>>, vector<16x32xf32>
    %19 = arith.addf %18, %17 : vector<16x32xf32>
    %c0_4 = arith.constant 0 : index
    %c0_5 = arith.constant 0 : index
    %20 = vector.load %arg4[%c0_4, %c0_5] : memref<16x32xf32, #tpu.memory_space<vmem>>, vector<16x32xf32>
    tpu.vector_store %arg4[%c0_4, %c0_5], %19 {strides = array<i32>} : memref<16x32xf32, #tpu.memory_space<vmem>>, vector<16x32xf32>,
    return
  }
  func.func @transform_0(%arg0: i32, %arg1: memref<1xi32, #tpu.memory_space<smem>>) -> (i32, i32) {
    %c0_i32 = arith.constant 0 : i32
    %c0_i32_0 = arith.constant 0 : i32
    return %arg0, %c0_i32 : i32, i32
  }
  func.func @transform_1(%arg0: i32, %arg1: memref<1xi32, #tpu.memory_space<smem>>) -> (i32, i32) {
    %c0_i32 = arith.constant 0 : i32
    %c0_i32_0 = arith.constant 0 : i32
    return %arg0, %c0_i32 : i32, i32
  }
  func.func @transform_2(%arg0: i32, %arg1: memref<1xi32, #tpu.memory_space<smem>>) -> (i32, i32) {
    %c0_i32 = arith.constant 0 : i32
    %c0_i32_0 = arith.constant 0 : i32
    return %arg0, %c0_i32 : i32, i32
  }
}

</mosaic_0001>

<llo_original>
// kernel: tpu_custom_call.1
$region0: #{tpu_custom_call.1}
  #allocation0 [shape = 'u32[]', space=smem, size = 0x4, offset = 0x4, fixed_abs, tag = 'smem constant byte address 0x4 - core index']
  #allocation1 [shape = 'u32[144,128]{1,0:T(1,128)}', space=vmem, size = 0x12000, scoped, tag = 'internal scratch']
  #allocation2 [shape = 's32[1]{0}', space=sflag, size = 0x4, scoped, tag = 'scoped memory for tpu_custom_call.1']
  #allocation3 [shape = 's32[1]{0:T(128)S(6)}', space=smem, size = 0x200, scoped, tag = 'prefetched SMEM operand 0']
  %s0 = inlined_call_operand.<no memory space> [shape: s32[1], index: 0, kind: input, shape index: {}]
  %s1 = inlined_call_operand.vmem [shape: f32[16,32], index: 1, kind: input, shape index: {}]
  %s2 = inlined_call_operand.vmem [shape: f32[16,1], index: 2, kind: input, shape index: {}]
  %s3 = inlined_call_operand.hbm [shape: f32[16,32], index: 3, kind: output, shape index: {}]
  %s4 = sld [smem:[#allocation0]]
  $region18: #{tpu_custom_call.1} parent=0
    _
  %s6 = ssub.s32 1, %s4
  %s7 = scalar_select 0, %s6, %s4
  %8 = sst [smem:[#allocation3]] %s0
  $region1: #{tpu_custom_call.1} parent=0
    #allocation4 [shape = 'u8[8192]{0}', space=vmem, size = 0x2000, scoped, tag = 'output window, operand 0, single buffered']
    #allocation5 [shape = 's32[1]{0}', space=sflag, size = 0x4, scoped, tag = 'scoped memory for tpu_custom_call.1']
    %9 = vsyncpa [#allocation5], 0
    // Predicated region
    $region2: #{tpu_custom_call.1} parent=1 // pred_check
      _
    $region3: #{tpu_custom_call.1} parent=1 // pred_check_branch
      %11 = sbr.rel (0) target = $region5
    $region4: #{tpu_custom_call.1} parent=1 // pred_region
      _
    $region5: #{tpu_custom_call.1} parent=1 // pred_fallthru
      _
    // Predicated region
    $region6: #{tpu_custom_call.1} parent=1 // pred_check
      _
    $region7: #{tpu_custom_call.1} parent=1 // pred_check_branch
      %13 = sbr.rel (0) target = $region9
    $region8: #{tpu_custom_call.1} parent=1 // pred_region
      _
    $region9: #{tpu_custom_call.1} parent=1 // pred_fallthru
      _
    %v14 = vlaneseq
    %v15 = vand.u32 %v14, 127
    %v16 = vand.u32 %v15, 1
    %v17 = vsub.s32 %v15, %v16
    %v18 = vcvt.s32.f32 %v17
    %v19 = vmul.f32 %v18, -0.28782314
    %v20 = vmul.f32 %v19, 1.442695
    %v21 = vpow.pop %v20
    %v22 = vld [vmem:[%s2] sm:$0xff]
    %v23 = vld [vmem:[%s2 + $0x8] sm:$0xff]
    %25 = vset.pattern.permute.xlu0 0
    %26 = vperm.xlu0 %25, %v22
    %v27 = vpop.permute.xlu0 %26
    %30 = vset.pattern.permute.xlu0 0
    %31 = vperm.xlu0 %30, %v23
    %v32 = vpop.permute.xlu0 %31
    %v34 = vmul.f32 %v27, %v21
    %v35 = vmul.f32 %v32, %v21
    %vm36 = vcmp.eq.s32.totalorder %v16, 0
    %v37 = vand.u32 2147483647, %v34
    %vm38 = vcmp.le.f32.partialorder %v37, 0.7853982
    %vm39 = vcmp.lt.s32.totalorder %v34, 0
    %v40 = vand.u32 %v34, 2139095040
    %v41 = vshrl.u32 %v40, 23
    %v42 = vsub.s32 %v41, 127
    %v43 = vand.u32 2147483647, %v34
    %v44 = vand.u32 %v43, 8388607
    %v45 = vor.u32 %v44, 8388608
    %v46 = vsub.s32 0, %v45
    %v47 = vadd.s32 %v42, 1
    %vm48 = vcmp.gt.s32.totalorder %v47, 0
    %v49 = vsel %vm48, %v47, 0
    %v50 = vshrl.u32 %v49, 5
    %v51 = vand.u32 %v49, 31
    %v52 = vsub.s32 32, %v51
    %v53 = vshrl.u32 683565275, %v52
    %v54 = vshll.u32 683565275, %v51
    %v55 = vshrl.u32 2475754826, %v52
    %v56 = vor.u32 %v54, %v55
    %v57 = vshll.u32 2475754826, %v51
    %v58 = vshrl.u32 2131351028, %v52
    %v59 = vor.u32 %v57, %v58
    %v60 = vshll.u32 2131351028, %v51
    %v61 = vshrl.u32 2102212464, %v52
    %v62 = vor.u32 %v60, %v61
    %v63 = vshll.u32 2102212464, %v51
    %v64 = vshrl.u32 920167782, %v52
    %v65 = vor.u32 %v63, %v64
    %v66 = vshll.u32 920167782, %v51
    %v67 = vshrl.u32 1326507024, %v52
    %v68 = vor.u32 %v66, %v67
    %vm69 = vcmp.lt.s32.totalorder %v50, 1
    %vm70 = vcmp.lt.s32.totalorder %v50, 2
    %vm71 = vcmp.lt.s32.totalorder %v50, 3
    %vm72 = vcmp.lt.s32.totalorder %v50, 4
    %v73 = vsel %vm69, %v53, %v56
    %v74 = vsel %vm72, %v62, 2102212464
    %v75 = vsel %vm71, %v59, %v74
    %v76 = vsel %vm70, %v73, %v75
    %v77 = vsel %vm69, %v56, %v59
    %v78 = vsel %vm72, %v65, 920167782
    %v79 = vsel %vm71, %v62, %v78
    %v80 = vsel %vm70, %v77, %v79
    %v81 = vsel %vm69, %v59, %v62
    %v82 = vsel %vm72, %v68, 1326507024
    %v83 = vsel %vm71, %v65, %v82
    %v84 = vsel %vm70, %v81, %v83
    %v85 = vshll.u32 %v45, 8
    %v86 = vmul.u32.u64.compose %v85, %v84
    %v87 = vextract.low.u32 %v86
    %v88 = vextract.high.u32 %v86
    %v89 = vmul.u32.u64.compose %v85, %v80
    %v90 = vextract.low.u32 %v89
    %v91 = vextract.high.u32 %v89
    %v92 = vmul.u32 %v85, %v76
    %v93 = vadd.s32 %v88, %v90
    %vm94 = vc.u32 %v88, %v90
    %v95 = vadd.s32 %v91, 1
    %v96 = vsel %vm94, %v95, %v91
    %v97 = vadd.s32 %v92, %v96
    %v98 = vadd.s32 %v97, 536870912
    %v99 = vshrl.u32 %v98, 30
    %v100 = vshll.u32 %v99, 30
    %v101 = vsub.s32 %v97, %v100
    %vm102 = vcmp.lt.s32.totalorder %v101, 0
    %v103 = vsub.s32 0, %v101
    %v104 = vsel %vm102, %v103, %v101
    %v105 = vclz %v104
    %v106 = vsub.s32 %v105, 2
    %vm107 = vcmp.gt.s32.totalorder 0, %v106
    %v108 = vsel %vm107, 0, %v106
    %v109 = vsub.s32 32, %v108
    %v110 = vshll.u32 %v101, %v108
    %v111 = vshrl.u32 %v93, %v109
    %v112 = vor.u32 %v110, %v111
    %v113 = vsub.s32 4294967266, %v108
    %v114 = vadd.s32 %v113, 127
    %v115 = vshll.u32 %v114, 23
    %v116 = vor.u32 4788187, %v115
    %v117 = vand.u32 2147483647, %v116
    %v119 = vcvt.s32.f32 %v112
    %v120 = vmul.f32 %v119, %v117
    %v121 = vxor.u32 %v120, 2147483648
    %v122 = vsel %vm39, %v121, %v120
    %v123 = vsub.s32 4, %v99
    %v124 = vsel %vm39, %v123, %v99
    %v125 = vsel %vm38, %v34, %v122
    %v126 = vsel %vm38, 0, %v124
    %v127 = vcosq.f32.pop %v125
    %v128 = vsinq.f32.pop %v125
    %vm129 = vweird.f32 %v34
    %v130 = vadd.s32 %v126, 3
    %v131 = vand.u32 %v130, 3
    %vm132 = vcmp.lt.s32.totalorder %v131, 2
    %vm133 = vcmp.eq.s32.totalorder %v131, 0
    %v134 = vxor.u32 %v128, 2147483648
    %v135 = vsel %vm133, %v127, %v134
    %vm136 = vcmp.eq.s32.totalorder %v131, 2
    %v137 = vxor.u32 %v127, 2147483648
    %v138 = vsel %vm136, %v137, %v128
    %v139 = vsel %vm132, %v135, %v138
    %v140 = vsel %vm129, nan, %v139
    %v141 = vand.u32 2147483647, %v35
    %vm142 = vcmp.le.f32.partialorder %v141, 0.7853982
    %vm143 = vcmp.lt.s32.totalorder %v35, 0
    %v144 = vand.u32 %v35, 2139095040
    %v145 = vshrl.u32 %v144, 23
    %v146 = vsub.s32 %v145, 127
    %v147 = vand.u32 2147483647, %v35
    %v148 = vand.u32 %v147, 8388607
    %v149 = vor.u32 %v148, 8388608
    %v150 = vsub.s32 0, %v149
    %v151 = vadd.s32 %v146, 1
    %vm152 = vcmp.gt.s32.totalorder %v151, 0
    %v153 = vsel %vm152, %v151, 0
    %v154 = vshrl.u32 %v153, 5
    %v155 = vand.u32 %v153, 31
    %v156 = vsub.s32 32, %v155
    %v157 = vshrl.u32 683565275, %v156
    %v158 = vshll.u32 683565275, %v155
    %v159 = vshrl.u32 2475754826, %v156
    %v160 = vor.u32 %v158, %v159
    %v161 = vshll.u32 2475754826, %v155
    %v162 = vshrl.u32 2131351028, %v156
    %v163 = vor.u32 %v161, %v162
    %v164 = vshll.u32 2131351028, %v155
    %v165 = vshrl.u32 2102212464, %v156
    %v166 = vor.u32 %v164, %v165
    %v167 = vshll.u32 2102212464, %v155
    %v168 = vshrl.u32 920167782, %v156
    %v169 = vor.u32 %v167, %v168
    %v170 = vshll.u32 920167782, %v155
    %v171 = vshrl.u32 1326507024, %v156
    %v172 = vor.u32 %v170, %v171
    %vm173 = vcmp.lt.s32.totalorder %v154, 1
    %vm174 = vcmp.lt.s32.totalorder %v154, 2
    %vm175 = vcmp.lt.s32.totalorder %v154, 3
    %vm176 = vcmp.lt.s32.totalorder %v154, 4
    %v177 = vsel %vm173, %v157, %v160
    %v178 = vsel %vm176, %v166, 2102212464
    %v179 = vsel %vm175, %v163, %v178
    %v180 = vsel %vm174, %v177, %v179
    %v181 = vsel %vm173, %v160, %v163
    %v182 = vsel %vm176, %v169, 920167782
    %v183 = vsel %vm175, %v166, %v182
    %v184 = vsel %vm174, %v181, %v183
    %v185 = vsel %vm173, %v163, %v166
    %v186 = vsel %vm176, %v172, 1326507024
    %v187 = vsel %vm175, %v169, %v186
    %v188 = vsel %vm174, %v185, %v187
    %v189 = vshll.u32 %v149, 8
    %v190 = vmul.u32.u64.compose %v189, %v188
    %v191 = vextract.low.u32 %v190
    %v192 = vextract.high.u32 %v190
    %v193 = vmul.u32.u64.compose %v189, %v184
    %v194 = vextract.low.u32 %v193
    %v195 = vextract.high.u32 %v193
    %v196 = vmul.u32 %v189, %v180
    %v197 = vadd.s32 %v192, %v194
    %vm198 = vc.u32 %v192, %v194
    %v199 = vadd.s32 %v195, 1
    %v200 = vsel %vm198, %v199, %v195
    %v201 = vadd.s32 %v196, %v200
    %v202 = vadd.s32 %v201, 536870912
    %v203 = vshrl.u32 %v202, 30
    %v204 = vshll.u32 %v203, 30
    %v205 = vsub.s32 %v201, %v204
    %vm206 = vcmp.lt.s32.totalorder %v205, 0
    %v207 = vsub.s32 0, %v205
    %v208 = vsel %vm206, %v207, %v205
    %v209 = vclz %v208
    %v210 = vsub.s32 %v209, 2
    %vm211 = vcmp.gt.s32.totalorder 0, %v210
    %v212 = vsel %vm211, 0, %v210
    %v213 = vsub.s32 32, %v212
    %v214 = vshll.u32 %v205, %v212
    %v215 = vshrl.u32 %v197, %v213
    %v216 = vor.u32 %v214, %v215
    %v217 = vsub.s32 4294967266, %v212
    %v218 = vadd.s32 %v217, 127
    %v219 = vshll.u32 %v218, 23
    %v220 = vor.u32 4788187, %v219
    %v221 = vand.u32 2147483647, %v220
    %v223 = vcvt.s32.f32 %v216
    %v224 = vmul.f32 %v223, %v221
    %v225 = vxor.u32 %v224, 2147483648
    %v226 = vsel %vm143, %v225, %v224
    %v227 = vsub.s32 4, %v203
    %v228 = vsel %vm143, %v227, %v203
    %v229 = vsel %vm142, %v35, %v226
    %v230 = vsel %vm142, 0, %v228
    %v231 = vcosq.f32.pop %v229
    %v232 = vsinq.f32.pop %v229
    %vm233 = vweird.f32 %v35
    %v234 = vadd.s32 %v230, 3
    %v235 = vand.u32 %v234, 3
    %vm236 = vcmp.lt.s32.totalorder %v235, 2
    %vm237 = vcmp.eq.s32.totalorder %v235, 0
    %v238 = vxor.u32 %v232, 2147483648
    %v239 = vsel %vm237, %v231, %v238
    %vm240 = vcmp.eq.s32.totalorder %v235, 2
    %v241 = vxor.u32 %v231, 2147483648
    %v242 = vsel %vm240, %v241, %v232
    %v243 = vsel %vm236, %v239, %v242
    %v244 = vsel %vm233, nan, %v243
    %v245 = vand.u32 2147483647, %v34
    %vm246 = vcmp.le.f32.partialorder %v245, 0.7853982
    %vm247 = vcmp.lt.s32.totalorder %v34, 0
    %v248 = vand.u32 %v34, 2139095040
    %v249 = vshrl.u32 %v248, 23
    %v250 = vsub.s32 %v249, 127
    %v251 = vand.u32 2147483647, %v34
    %v252 = vand.u32 %v251, 8388607
    %v253 = vor.u32 %v252, 8388608
    %v254 = vsub.s32 0, %v253
    %v255 = vadd.s32 %v250, 1
    %vm256 = vcmp.gt.s32.totalorder %v255, 0
    %v257 = vsel %vm256, %v255, 0
    %v258 = vshrl.u32 %v257, 5
    %v259 = vand.u32 %v257, 31
    %v260 = vsub.s32 32, %v259
    %v261 = vshrl.u32 683565275, %v260
    %v262 = vshll.u32 683565275, %v259
    %v263 = vshrl.u32 2475754826, %v260
    %v264 = vor.u32 %v262, %v263
    %v265 = vshll.u32 2475754826, %v259
    %v266 = vshrl.u32 2131351028, %v260
    %v267 = vor.u32 %v265, %v266
    %v268 = vshll.u32 2131351028, %v259
    %v269 = vshrl.u32 2102212464, %v260
    %v270 = vor.u32 %v268, %v269
    %v271 = vshll.u32 2102212464, %v259
    %v272 = vshrl.u32 920167782, %v260
    %v273 = vor.u32 %v271, %v272
    %v274 = vshll.u32 920167782, %v259
    %v275 = vshrl.u32 1326507024, %v260
    %v276 = vor.u32 %v274, %v275
    %vm277 = vcmp.lt.s32.totalorder %v258, 1
    %vm278 = vcmp.lt.s32.totalorder %v258, 2
    %vm279 = vcmp.lt.s32.totalorder %v258, 3
    %vm280 = vcmp.lt.s32.totalorder %v258, 4
    %v281 = vsel %vm277, %v261, %v264
    %v282 = vsel %vm280, %v270, 2102212464
    %v283 = vsel %vm279, %v267, %v282
    %v284 = vsel %vm278, %v281, %v283
    %v285 = vsel %vm277, %v264, %v267
    %v286 = vsel %vm280, %v273, 920167782
    %v287 = vsel %vm279, %v270, %v286
    %v288 = vsel %vm278, %v285, %v287
    %v289 = vsel %vm277, %v267, %v270
    %v290 = vsel %vm280, %v276, 1326507024
    %v291 = vsel %vm279, %v273, %v290
    %v292 = vsel %vm278, %v289, %v291
    %v293 = vshll.u32 %v253, 8
    %v294 = vmul.u32.u64.compose %v293, %v292
    %v295 = vextract.low.u32 %v294
    %v296 = vextract.high.u32 %v294
    %v297 = vmul.u32.u64.compose %v293, %v288
    %v298 = vextract.low.u32 %v297
    %v299 = vextract.high.u32 %v297
    %v300 = vmul.u32 %v293, %v284
    %v301 = vadd.s32 %v296, %v298
    %vm302 = vc.u32 %v296, %v298
    %v303 = vadd.s32 %v299, 1
    %v304 = vsel %vm302, %v303, %v299
    %v305 = vadd.s32 %v300, %v304
    %v306 = vadd.s32 %v305, 536870912
    %v307 = vshrl.u32 %v306, 30
    %v308 = vshll.u32 %v307, 30
    %v309 = vsub.s32 %v305, %v308
    %vm310 = vcmp.lt.s32.totalorder %v309, 0
    %v311 = vsub.s32 0, %v309
    %v312 = vsel %vm310, %v311, %v309
    %v313 = vclz %v312
    %v314 = vsub.s32 %v313, 2
    %vm315 = vcmp.gt.s32.totalorder 0, %v314
    %v316 = vsel %vm315, 0, %v314
    %v317 = vsub.s32 32, %v316
    %v318 = vshll.u32 %v309, %v316
    %v319 = vshrl.u32 %v301, %v317
    %v320 = vor.u32 %v318, %v319
    %v321 = vsub.s32 4294967266, %v316
    %v322 = vadd.s32 %v321, 127
    %v323 = vshll.u32 %v322, 23
    %v324 = vor.u32 4788187, %v323
    %v325 = vand.u32 2147483647, %v324
    %v327 = vcvt.s32.f32 %v320
    %v328 = vmul.f32 %v327, %v325
    %v329 = vxor.u32 %v328, 2147483648
    %v330 = vsel %vm247, %v329, %v328
    %v331 = vsub.s32 4, %v307
    %v332 = vsel %vm247, %v331, %v307
    %v333 = vsel %vm246, %v34, %v330
    %v334 = vsel %vm246, 0, %v332
    %v335 = vcosq.f32.pop %v333
    %v336 = vsinq.f32.pop %v333
    %vm337 = vweird.f32 %v34
    %v338 = vand.u32 %v334, 3
    %vm339 = vcmp.lt.s32.totalorder %v338, 2
    %vm340 = vcmp.eq.s32.totalorder %v338, 0
    %v341 = vxor.u32 %v336, 2147483648
    %v342 = vsel %vm340, %v335, %v341
    %vm343 = vcmp.eq.s32.totalorder %v338, 2
    %v344 = vxor.u32 %v335, 2147483648
    %v345 = vsel %vm343, %v344, %v336
    %v346 = vsel %vm339, %v342, %v345
    %v347 = vsel %vm337, nan, %v346
    %v348 = vand.u32 2147483647, %v35
    %vm349 = vcmp.le.f32.partialorder %v348, 0.7853982
    %vm350 = vcmp.lt.s32.totalorder %v35, 0
    %v351 = vand.u32 %v35, 2139095040
    %v352 = vshrl.u32 %v351, 23
    %v353 = vsub.s32 %v352, 127
    %v354 = vand.u32 2147483647, %v35
    %v355 = vand.u32 %v354, 8388607
    %v356 = vor.u32 %v355, 8388608
    %v357 = vsub.s32 0, %v356
    %v358 = vadd.s32 %v353, 1
    %vm359 = vcmp.gt.s32.totalorder %v358, 0
    %v360 = vsel %vm359, %v358, 0
    %v361 = vshrl.u32 %v360, 5
    %v362 = vand.u32 %v360, 31
    %v363 = vsub.s32 32, %v362
    %v364 = vshrl.u32 683565275, %v363
    %v365 = vshll.u32 683565275, %v362
    %v366 = vshrl.u32 2475754826, %v363
    %v367 = vor.u32 %v365, %v366
    %v368 = vshll.u32 2475754826, %v362
    %v369 = vshrl.u32 2131351028, %v363
    %v370 = vor.u32 %v368, %v369
    %v371 = vshll.u32 2131351028, %v362
    %v372 = vshrl.u32 2102212464, %v363
    %v373 = vor.u32 %v371, %v372
    %v374 = vshll.u32 2102212464, %v362
    %v375 = vshrl.u32 920167782, %v363
    %v376 = vor.u32 %v374, %v375
    %v377 = vshll.u32 920167782, %v362
    %v378 = vshrl.u32 1326507024, %v363
    %v379 = vor.u32 %v377, %v378
    %vm380 = vcmp.lt.s32.totalorder %v361, 1
    %vm381 = vcmp.lt.s32.totalorder %v361, 2
    %vm382 = vcmp.lt.s32.totalorder %v361, 3
    %vm383 = vcmp.lt.s32.totalorder %v361, 4
    %v384 = vsel %vm380, %v364, %v367
    %v385 = vsel %vm383, %v373, 2102212464
    %v386 = vsel %vm382, %v370, %v385
    %v387 = vsel %vm381, %v384, %v386
    %v388 = vsel %vm380, %v367, %v370
    %v389 = vsel %vm383, %v376, 920167782
    %v390 = vsel %vm382, %v373, %v389
    %v391 = vsel %vm381, %v388, %v390
    %v392 = vsel %vm380, %v370, %v373
    %v393 = vsel %vm383, %v379, 1326507024
    %v394 = vsel %vm382, %v376, %v393
    %v395 = vsel %vm381, %v392, %v394
    %v396 = vshll.u32 %v356, 8
    %v397 = vmul.u32.u64.compose %v396, %v395
    %v398 = vextract.low.u32 %v397
    %v399 = vextract.high.u32 %v397
    %v400 = vmul.u32.u64.compose %v396, %v391
    %v401 = vextract.low.u32 %v400
    %v402 = vextract.high.u32 %v400
    %v403 = vmul.u32 %v396, %v387
    %v404 = vadd.s32 %v399, %v401
    %vm405 = vc.u32 %v399, %v401
    %v406 = vadd.s32 %v402, 1
    %v407 = vsel %vm405, %v406, %v402
    %v408 = vadd.s32 %v403, %v407
    %v409 = vadd.s32 %v408, 536870912
    %v410 = vshrl.u32 %v409, 30
    %v411 = vshll.u32 %v410, 30
    %v412 = vsub.s32 %v408, %v411
    %vm413 = vcmp.lt.s32.totalorder %v412, 0
    %v414 = vsub.s32 0, %v412
    %v415 = vsel %vm413, %v414, %v412
    %v416 = vclz %v415
    %v417 = vsub.s32 %v416, 2
    %vm418 = vcmp.gt.s32.totalorder 0, %v417
    %v419 = vsel %vm418, 0, %v417
    %v420 = vsub.s32 32, %v419
    %v421 = vshll.u32 %v412, %v419
    %v422 = vshrl.u32 %v404, %v420
    %v423 = vor.u32 %v421, %v422
    %v424 = vsub.s32 4294967266, %v419
    %v425 = vadd.s32 %v424, 127
    %v426 = vshll.u32 %v425, 23
    %v427 = vor.u32 4788187, %v426
    %v428 = vand.u32 2147483647, %v427
    %v430 = vcvt.s32.f32 %v423
    %v431 = vmul.f32 %v430, %v428
    %v432 = vxor.u32 %v431, 2147483648
    %v433 = vsel %vm350, %v432, %v431
    %v434 = vsub.s32 4, %v410
    %v435 = vsel %vm350, %v434, %v410
    %v436 = vsel %vm349, %v35, %v433
    %v437 = vsel %vm349, 0, %v435
    %v438 = vcosq.f32.pop %v436
    %v439 = vsinq.f32.pop %v436
    %vm440 = vweird.f32 %v35
    %v441 = vand.u32 %v437, 3
    %vm442 = vcmp.lt.s32.totalorder %v441, 2
    %vm443 = vcmp.eq.s32.totalorder %v441, 0
    %v444 = vxor.u32 %v439, 2147483648
    %v445 = vsel %vm443, %v438, %v444
    %vm446 = vcmp.eq.s32.totalorder %v441, 2
    %v447 = vxor.u32 %v438, 2147483648
    %v448 = vsel %vm446, %v447, %v439
    %v449 = vsel %vm442, %v445, %v448
    %v450 = vsel %vm440, nan, %v449
    %v451 = vsel %vm36, %v140, %v347
    %v452 = vsel %vm36, %v244, %v450
    %v453 = vld [vmem:[%s1] sm:$0xff]
    %v454 = vld [vmem:[%s1 + $0x8] sm:$0xff]
    %v455 = vadd.f32 %v453, %v451
    %v456 = vadd.f32 %v454, %v452
    %vm457 = vcmask 261120
    %458 = vst.msk [vmem:[#allocation4] sm:$0xff] %vm457, %v455
    %459 = vst.msk [vmem:[#allocation4 + $0x8] sm:$0xff] %vm457, %v456
    // Predicated region
    $region10: #{tpu_custom_call.1} parent=1 // pred_check
      _
    $region11: #{tpu_custom_call.1} parent=1 // pred_check_branch
      %461 = sbr.rel (0) target = $region13
    $region12: #{tpu_custom_call.1} parent=1 // pred_region
      %s463 = ssub.s32 256, 256
      %464 = vsyncadd [#allocation5], %s463
      %s465 = sshll.u32 [#allocation4], 4
      %s466 = int_to_ptr.vmem [resolvable:$true] %s465
      %471 = dma.vmem_to_hbm [thread:$0]  %s466, 256, %s3, [#allocation5], 128, 128, 8
    $region13: #{tpu_custom_call.1} parent=1 // pred_fallthru
      _
    // Predicated region
    $region14: #{tpu_custom_call.1} parent=1 // pred_check
      _
    $region15: #{tpu_custom_call.1} parent=1 // pred_check_branch
      %473 = sbr.rel (0) target = $region17
    $region16: #{tpu_custom_call.1} parent=1 // pred_region
      %474 = dma.done [#allocation5], 256
    $region17: #{tpu_custom_call.1} parent=1 // pred_fallthru
      _
    %475 = vsyncpa [#allocation5], 1

</llo_original>
